<compile_context>
chip_gen: v5e
topology: v5e:2x2
jax: 0.10.0
libtpu: 0.0.40
codegen_flags: <defaults>
</compile_context>

<pallas_src>
import functools

import jax
import jax.numpy as jnp
from jax.experimental import pallas as pl
from jax.experimental.pallas import tpu as pltpu

BN_EPS = 1e-5


def _round_up(x, m):
    return ((x + m - 1) // m) * m


# ------------------------------ Pallas kernel ---------------------------------
def _decode_pass1_kernel(x_ref, w_ref, mask_ref, y_ref, sum_ref, sumsq_ref,
                         *, shifts, tile_m):
    """Windowed sub-pixel transposed conv -> bf16 y + per-tile BN partials.

    x_ref   : (Cin, TILE_M + HALO) bf16  flattened (n, rr, cc) input columns,
              already ReLU'd / zero padded in the glue.
    w_ref   : (WS*WS, SC, Cin)     bf16  per-window-offset sub-pixel weights
              (grid-invariant, constant index_map).
    mask_ref: (1, TILE_M)          bf16  1 for real (n<N, rr<Bh, cc<Bw) output
              columns, 0 for padding columns.
    y_ref   : (SC, TILE_M)         bf16  un-normalized conv output (lane dense).
    sum_ref, sumsq_ref: (1, 1, SC) f32   per-tile BN partial statistics
              (channel axis on lanes); reduced across tiles in the XLA glue.
    """
    x = x_ref[...]                                          # (Cin, TILE_M + HALO)
    acc = None
    for q, d in enumerate(shifts):                          # WS*WS static shifts
        xq = x[:, d:d + tile_m]                             # (Cin, TILE_M)
        part = jnp.dot(w_ref[q], xq, preferred_element_type=jnp.float32)
        acc = part if acc is None else acc + part           # (SC, TILE_M) f32
    msk = mask_ref[...].astype(jnp.float32)                 # (1, TILE_M)
    ym = acc * msk                                          # padded lanes -> 0
    y_ref[...] = acc.astype(y_ref.dtype)
    sum_ref[0, 0] = jnp.sum(ym, axis=1)                     # (SC,)
    sumsq_ref[0, 0] = jnp.sum(ym * acc, axis=1)             # (SC,)


# ------------------------------- helpers ---------------------------------------
def _vmem_budget():
    """Generation-aware (tile-budget, vmem_limit) in bytes."""
    try:
        cap = int(pltpu.get_tpu_info().vmem_capacity_bytes)
    except Exception:
        cap = 64 * 1024 * 1024          # conservative: v7x has 64 MiB per core
    tile_budget = min(cap // 2, 64 * 1024 * 1024)
    vmem_limit = min((cap * 3) // 4, 96 * 1024 * 1024)
    return tile_budget, vmem_limit


def _pick_tile_m(mp_raw, cin, sc, ws, halo, budget_bytes):
    """Largest multiple-of-128 M tile whose double-buffered working set fits the
    budget; M itself is padded up to a multiple of the tile (pl.cdiv grid)."""
    cin_p = max(_round_up(cin, 16), 16)                     # bf16 sublane packing
    sc_p = max(_round_up(sc, 16), 16)
    w_bytes = 2 * ws * ws * sc_p * max(_round_up(cin, 128), 128) * 2

    def need(tm):
        x_b = 2 * cin_p * (tm + halo) * 2                   # double-buffered input
        m_b = 2 * 16 * tm * 2                               # mask tile
        y_b = 2 * sc_p * tm * 2                             # double-buffered output
        tmp = 3 * max(_round_up(sc, 8), 8) * tm * 4         # f32 accumulator/temps
        return x_b + m_b + y_b + tmp + w_bytes + (2 << 20)

    cap = max(_round_up(mp_raw, 128), 128)
    best, tm = 128, 128
    while tm <= min(cap, 32768):
        if need(tm) <= budget_bytes:
            best = tm
        tm += 128
    # Prefer >= 2 grid steps when there is enough work so a megacore part
    # (v7x: 2 TensorCores) can shard the "parallel" grid axis.
    if mp_raw > 128 and pl.cdiv(mp_raw, best) < 2:
        best = max(128, _round_up(pl.cdiv(mp_raw, 2), 128))
    # The in-kernel window must see the whole halo inside one block.
    return max(best, halo)


def _subpixel_taps(k, s, p):
    """taps[r] = [(kernel index kh, input offset d)] for output row oh = s*b + r:
    out[s*b + r] = sum_t x[b + d_t] * w[kh_t]."""
    taps = []
    for r in range(s):
        base = (r + p) % s
        q = (r + p) // s
        lst = []
        kk, t = base, 0
        while kk < k:
            lst.append((kk, q - t))
            kk += s
            t += 1
        taps.append(lst)
    return taps


# ------------------------------- forward ---------------------------------------
def decodeconv_forward(x1, x2, weight, bias, gamma, beta, *, stride, padding):
    """Decodeconv(in_c, out_c, k, stride, padding, if_bn=True, activate='ReLU',
    if_dropout=False).forward(x1, x2).  x1, x2 are NCHW float32.
    `bias` is accepted but unused: with BatchNorm right after the transposed
    conv, a per-channel bias is exactly cancelled by the mean subtraction."""
    del bias
    N, Cin, H, W = x1.shape
    Cin_w, Cout, kH, kW = weight.shape
    assert Cin_w == Cin
    assert kH == kW, "module passes a single (square) kernel_size"
    k, s, p = kH, stride, padding
    Hout = (H - 1) * s - 2 * p + k
    Wout = (W - 1) * s - 2 * p + k
    # TODO(synk): configs with (k - 2p) % s != 0 need per-parity output masking.
    assert Hout % s == 0 and Wout % s == 0, "sub-pixel path needs s | Hout, s | Wout"
    Bh, Bw = Hout // s, Wout // s

    taps = _subpixel_taps(k, s, p)
    d_all = [d for lst in taps for (_, d) in lst]
    d_min, d_max = (min(d_all), max(d_all)) if d_all else (0, 0)
    WS = d_max - d_min + 1
    Hp, Wp = Bh + WS - 1, Bw + WS - 1
    SC = s * s * Cout

    # --- glue: ReLU + pad/crop the input window (offsets d_min..d_max per base px)
    pad_lo = max(0, -d_min)
    off = max(0, d_min)
    pad_hi_h = max(0, d_min + Hp - H)
    pad_hi_w = max(0, d_min + Wp - W)
    xr = jnp.maximum(x1, 0.0)                       # ReLU in glue (fuses into pad)
    xq = jnp.pad(xr, ((0, 0), (0, 0), (pad_lo, pad_hi_h), (pad_lo, pad_hi_w)))
    xw = xq[:, :, off:off + Hp, off:off + Wp]       # (N, Cin, Hp, Wp)

    # --- glue: flatten to (Cin, M) ONCE (no WS^2 replication); M = (n, rr, cc) ---
    Mp_raw = N * Hp * Wp
    x_flat = xw.transpose(1, 0, 2, 3).reshape(Cin, Mp_raw).astype(jnp.bfloat16)

    max_shift = (WS - 1) * (Wp + 1)
    HALO = _round_up(max(max_shift, 1), 128)
    tile_budget, vmem_limit = _vmem_budget()
    TM = _pick_tile_m(Mp_raw, Cin, SC, WS, HALO, tile_budget)
    T = pl.cdiv(Mp_raw, TM)
    Mp = T * TM

    # Per-tile input block i = columns [i*TM, i*TM + TM + HALO) of the padded slab.
    xpad = jnp.pad(x_flat, ((0, 0), (0, Mp + TM - Mp_raw)))
    x_main = xpad[:, :Mp].reshape(Cin, T, TM)
    x_next = xpad[:, TM:TM + Mp].reshape(Cin, T, TM)[:, :, :HALO]
    x_halo = jnp.concatenate([x_main, x_next], axis=2).reshape(Cin, T * (TM + HALO))

    # --- glue: validity mask (rr < Bh, cc < Bw, real column) for the BN stats ----
    valid = (jnp.arange(Hp) < Bh)[:, None] & (jnp.arange(Wp) < Bw)[None, :]
    mask = jnp.tile(valid.reshape(-1), N)
    mask = jnp.pad(mask, (0, Mp - Mp_raw)).astype(jnp.bfloat16).reshape(1, Mp)

    # --- glue: combined sub-pixel weight (WS*WS window offsets, SC = s*s*Cout) ----
    w_sub = jnp.zeros((WS, WS, s, s, Cout, Cin), jnp.float32)
    for rh in range(s):
        for (kh, dh) in taps[rh]:
            for rw in range(s):
                for (kw, dw) in taps[rw]:
                    w_sub = w_sub.at[dh - d_min, dw - d_min, rh, rw].add(
                        weight[:, :, kh, kw].T)
    wt = w_sub.reshape(WS * WS, SC, Cin).astype(jnp.bfloat16)
    shifts = tuple(jh * Wp + jw for jh in range(WS) for jw in range(WS))

    # --- pass 1 (only pass): windowed matmul -> bf16 y + per-tile BN partials ----
    kernel = functools.partial(_decode_pass1_kernel, shifts=shifts, tile_m=TM)
    y, psum, psumsq = pl.pallas_call(
        kernel,
        out_shape=(jax.ShapeDtypeStruct((SC, Mp), jnp.bfloat16),
                   jax.ShapeDtypeStruct((T, 1, SC), jnp.float32),
                   jax.ShapeDtypeStruct((T, 1, SC), jnp.float32)),
        grid=(T,),
        in_specs=[pl.BlockSpec((Cin, TM + HALO), lambda i: (0, i)),
                  pl.BlockSpec((WS * WS, SC, Cin), lambda i: (0, 0, 0)),
                  pl.BlockSpec((1, TM), lambda i: (0, i))],
        out_specs=(pl.BlockSpec((SC, TM), lambda i: (0, i)),
                   pl.BlockSpec((1, 1, SC), lambda i: (i, 0, 0)),
                   pl.BlockSpec((1, 1, SC), lambda i: (i, 0, 0))),
        compiler_params=pltpu.CompilerParams(
            # Per-tile BN partials make sharding this axis across cores safe.
            dimension_semantics=("parallel",),
            vmem_limit_bytes=vmem_limit),
        cost_estimate=pl.CostEstimate(
            flops=2 * Mp * WS * WS * Cin * SC,
            transcendentals=0,
            bytes_accessed=(Cin * T * (TM + HALO) * 2 + WS * WS * SC * Cin * 2
                            + Mp * 2 + SC * Mp * 2 + 2 * T * SC * 4)),
    )(x_halo, wt, mask)

    # --- glue: reduce partials -> BatchNorm2d batch statistics (biased variance) --
    count = jnp.float32(N * Hout * Wout)
    sum_co = psum.sum(axis=(0, 1)).reshape(s * s, Cout).sum(axis=0)
    sumsq_co = psumsq.sum(axis=(0, 1)).reshape(s * s, Cout).sum(axis=0)
    mean = sum_co / count
    var = jnp.maximum(sumsq_co / count - mean * mean, 0.0)
    inv = jax.lax.rsqrt(var + BN_EPS)
    scale_co = gamma.astype(jnp.float32) * inv
    shift_co = beta.astype(jnp.float32) - mean * scale_co
    # TODO(synk): running_mean/running_var momentum updates (module state) are
    # not produced; only the training-mode forward output is computed.
    scale_sc = jnp.tile(scale_co, s * s)[:, None]           # (SC, 1)
    shift_sc = jnp.tile(shift_co, s * s)[:, None]

    # --- glue: BN affine folded into the pixel-shuffle epilogue (one traversal) ---
    y32 = y[:, :Mp_raw].astype(jnp.float32) * scale_sc + shift_sc
    out = y32.reshape(s, s, Cout, N, Hp, Wp)[:, :, :, :, :Bh, :Bw]
    out = out.transpose(3, 2, 4, 0, 5, 1).reshape(N, Cout, Hout, Wout)
    # TODO(synk): the final concat copy could be avoided with buffer donation.
    return jnp.concatenate([out, x2.astype(out.dtype)], axis=1)


# ----------------------------- pure-JAX reference ------------------------------
def _ref_forward(x1, x2, weight, bias, gamma, beta, *, stride, padding):
    """Reference ConvTranspose2d -> BN -> concat.  Matmul operands are rounded to
    bf16 (f32 accumulation) to mirror the kernel's MXU dtype choice; the pre-BN
    activation is kept in f32 (the kernel stores it in bf16)."""
    N, Cin, H, W = x1.shape
    _, Cout, kH, kW = weight.shape
    s, p = stride, padding
    Hout = (H - 1) * s - 2 * p + kH
    Wout = (W - 1) * s - 2 * p + kW
    xr = jnp.maximum(x1, 0.0).astype(jnp.bfloat16).astype(jnp.float32)
    wq = weight.astype(jnp.bfloat16).astype(jnp.float32)
    out = jnp.zeros((N, Cout, Hout + 2 * p, Wout + 2 * p), jnp.float32)
    for kh in range(kH):
        for kw in range(kW):
            contrib = jnp.einsum('nchw,cd->ndhw', xr, wq[:, :, kh, kw])
            out = out.at[:, :, kh:kh + (H - 1) * s + 1:s,
                         kw:kw + (W - 1) * s + 1:s].add(contrib)
    out = out[:, :, p:p + Hout, p:p + Wout] + bias[None, :, None, None]
    mean = jnp.mean(out, axis=(0, 2, 3), keepdims=True)
    var = jnp.mean((out - mean) ** 2, axis=(0, 2, 3), keepdims=True)
    out = (out - mean) * jax.lax.rsqrt(var + BN_EPS)
    out = gamma[None, :, None, None] * out + beta[None, :, None, None]
    return jnp.concatenate([out, x2], axis=1)


if __name__ == "__main__":
    # Decodeconv(in_c=4, out_c=4, kernel_size=4, stride=2, padding=1,
    #            if_bn=True, activate='ReLU', if_dropout=False)
    N, in_c, out_c = 2, 4, 4
    k, stride, padding = 4, 2, 1
    H = W = 8
    Hout = (H - 1) * stride - 2 * padding + k            # 16

    key = jax.random.PRNGKey(0)
    k1, k2, k3, k4 = jax.random.split(key, 4)
    x1 = jax.random.normal(k1, (N, in_c, H, W), jnp.float32)
    x2 = jax.random.normal(k2, (N, in_c, Hout, Hout), jnp.float32)
    weight = jax.random.normal(k3, (in_c, out_c, k, k), jnp.float32) * 0.1
    bias = jax.random.normal(k4, (out_c,), jnp.float32) * 0.1
    gamma = jnp.ones((out_c,), jnp.float32)              # BatchNorm2d default init
    beta = jnp.zeros((out_c,), jnp.float32)
    # TODO(synk): Dropout(0.5) branch (if_dropout=True) is not instantiated here.

    fwd = jax.jit(functools.partial(decodeconv_forward,
                                    stride=stride, padding=padding))
    out = jax.block_until_ready(fwd(x1, x2, weight, bias, gamma, beta))

    ref = _ref_forward(x1, x2, weight, bias, gamma, beta,
                       stride=stride, padding=padding)
    assert out.shape == (N, 2 * out_c, Hout, Hout), out.shape
    err = float(jnp.max(jnp.abs(out - ref)))
    # Tolerance accounts for the bf16 pre-BN activation (|err| ~ 2^-9 * |y| / std).
    assert jnp.allclose(out, ref, atol=3e-2, rtol=3e-2), err
    print("KERNEL_OK")
</pallas_src>

<mosaic_0001>
module attributes {stable_mosaic.version = 11 : i64} {
  func.func @_decode_pass1_kernel(%arg0: i32, %arg1: memref<4x256xbf16, #tpu.memory_space<vmem>>, %arg2: memref<9x16x4xbf16, #tpu.memory_space<vmem>>, %arg3: memref<1x128xbf16, #tpu.memory_space<vmem>>, %arg4: memref<16x128xbf16, #tpu.memory_space<vmem>>, %arg5: memref<1x1x16xf32, #tpu.memory_space<vmem>>, %arg6: memref<1x1x16xf32, #tpu.memory_space<vmem>>) attributes {dimension_semantics = [#tpu.dimension_semantics<parallel>], iteration_bounds = array<i64: 2>, scalar_prefetch = 0 : i64, scratch_operands = 0 : i64, tpu.core_type = #tpu.core_type<tc>, window_params = [{transform_indices = @transform_0, window_bounds = array<i64: 4, 256>}, {pipeline_mode = #tpu.pipeline_mode<synchronous>, transform_indices = @transform_1, window_bounds = array<i64: 9, 16, 4>}, {transform_indices = @transform_2, window_bounds = array<i64: 1, 128>}, {transform_indices = @transform_3, window_bounds = array<i64: 16, 128>}, {transform_indices = @transform_4, window_bounds = array<i64: 1, 1, 16>}, {transform_indices = @transform_5, window_bounds = array<i64: 1, 1, 16>}]} {
    %c0 = arith.constant 0 : index
    %c0_0 = arith.constant 0 : index
    %0 = vector.load %arg1[%c0, %c0_0] : memref<4x256xbf16, #tpu.memory_space<vmem>>, vector<4x256xbf16>
    %1 = vector.extract_strided_slice %0 {offsets = [0, 0], sizes = [4, 128], strides = [1, 1]} : vector<4x256xbf16> to vector<4x128xbf16>
    %c0_1 = arith.constant 0 : index
    %c0_2 = arith.constant 0 : index
    %c0_3 = arith.constant 0 : index
    %2 = vector.load %arg2[%c0_1, %c0_2, %c0_3] : memref<9x16x4xbf16, #tpu.memory_space<vmem>>, vector<1x16x4xbf16>
    %3 = vector.shape_cast %2 : vector<1x16x4xbf16> to vector<16x4xbf16>
    %cst = arith.constant dense<0.000000e+00> : vector<16x128xf32>
    %4 = tpu.matmul %3, %1, %cst {dimension_numbers = #tpu.dot_dimension_numbers<[1], [0], [0], [1], [0, 0, 1, 1], [], []>} : vector<16x4xbf16>, vector<4x128xbf16>, vector<16x128xf32> -> vector<16x128xf32>
    %5 = vector.extract_strided_slice %0 {offsets = [0, 1], sizes = [4, 128], strides = [1, 1]} : vector<4x256xbf16> to vector<4x128xbf16>
    %c1 = arith.constant 1 : index
    %c0_4 = arith.constant 0 : index
    %c0_5 = arith.constant 0 : index
    %6 = vector.load %arg2[%c1, %c0_4, %c0_5] : memref<9x16x4xbf16, #tpu.memory_space<vmem>>, vector<1x16x4xbf16>
    %7 = vector.shape_cast %6 : vector<1x16x4xbf16> to vector<16x4xbf16>
    %cst_6 = arith.constant dense<0.000000e+00> : vector<16x128xf32>
    %8 = tpu.matmul %7, %5, %cst_6 {dimension_numbers = #tpu.dot_dimension_numbers<[1], [0], [0], [1], [0, 0, 1, 1], [], []>} : vector<16x4xbf16>, vector<4x128xbf16>, vector<16x128xf32> -> vector<16x128xf32>
    %9 = arith.addf %4, %8 : vector<16x128xf32>
    %10 = vector.extract_strided_slice %0 {offsets = [0, 2], sizes = [4, 128], strides = [1, 1]} : vector<4x256xbf16> to vector<4x128xbf16>
    %c2 = arith.constant 2 : index
    %c0_7 = arith.constant 0 : index
    %c0_8 = arith.constant 0 : index
    %11 = vector.load %arg2[%c2, %c0_7, %c0_8] : memref<9x16x4xbf16, #tpu.memory_space<vmem>>, vector<1x16x4xbf16>
    %12 = vector.shape_cast %11 : vector<1x16x4xbf16> to vector<16x4xbf16>
    %cst_9 = arith.constant dense<0.000000e+00> : vector<16x128xf32>
    %13 = tpu.matmul %12, %10, %cst_9 {dimension_numbers = #tpu.dot_dimension_numbers<[1], [0], [0], [1], [0, 0, 1, 1], [], []>} : vector<16x4xbf16>, vector<4x128xbf16>, vector<16x128xf32> -> vector<16x128xf32>
    %14 = arith.addf %9, %13 : vector<16x128xf32>
    %15 = vector.extract_strided_slice %0 {offsets = [0, 10], sizes = [4, 128], strides = [1, 1]} : vector<4x256xbf16> to vector<4x128xbf16>
    %c3 = arith.constant 3 : index
    %c0_10 = arith.constant 0 : index
    %c0_11 = arith.constant 0 : index
    %16 = vector.load %arg2[%c3, %c0_10, %c0_11] : memref<9x16x4xbf16, #tpu.memory_space<vmem>>, vector<1x16x4xbf16>
    %17 = vector.shape_cast %16 : vector<1x16x4xbf16> to vector<16x4xbf16>
    %cst_12 = arith.constant dense<0.000000e+00> : vector<16x128xf32>
    %18 = tpu.matmul %17, %15, %cst_12 {dimension_numbers = #tpu.dot_dimension_numbers<[1], [0], [0], [1], [0, 0, 1, 1], [], []>} : vector<16x4xbf16>, vector<4x128xbf16>, vector<16x128xf32> -> vector<16x128xf32>
    %19 = arith.addf %14, %18 : vector<16x128xf32>
    %20 = vector.extract_strided_slice %0 {offsets = [0, 11], sizes = [4, 128], strides = [1, 1]} : vector<4x256xbf16> to vector<4x128xbf16>
    %c4 = arith.constant 4 : index
    %c0_13 = arith.constant 0 : index
    %c0_14 = arith.constant 0 : index
    %21 = vector.load %arg2[%c4, %c0_13, %c0_14] : memref<9x16x4xbf16, #tpu.memory_space<vmem>>, vector<1x16x4xbf16>
    %22 = vector.shape_cast %21 : vector<1x16x4xbf16> to vector<16x4xbf16>
    %cst_15 = arith.constant dense<0.000000e+00> : vector<16x128xf32>
    %23 = tpu.matmul %22, %20, %cst_15 {dimension_numbers = #tpu.dot_dimension_numbers<[1], [0], [0], [1], [0, 0, 1, 1], [], []>} : vector<16x4xbf16>, vector<4x128xbf16>, vector<16x128xf32> -> vector<16x128xf32>
    %24 = arith.addf %19, %23 : vector<16x128xf32>
    %25 = vector.extract_strided_slice %0 {offsets = [0, 12], sizes = [4, 128], strides = [1, 1]} : vector<4x256xbf16> to vector<4x128xbf16>
    %c5 = arith.constant 5 : index
    %c0_16 = arith.constant 0 : index
    %c0_17 = arith.constant 0 : index
    %26 = vector.load %arg2[%c5, %c0_16, %c0_17] : memref<9x16x4xbf16, #tpu.memory_space<vmem>>, vector<1x16x4xbf16>
    %27 = vector.shape_cast %26 : vector<1x16x4xbf16> to vector<16x4xbf16>
    %cst_18 = arith.constant dense<0.000000e+00> : vector<16x128xf32>
    %28 = tpu.matmul %27, %25, %cst_18 {dimension_numbers = #tpu.dot_dimension_numbers<[1], [0], [0], [1], [0, 0, 1, 1], [], []>} : vector<16x4xbf16>, vector<4x128xbf16>, vector<16x128xf32> -> vector<16x128xf32>
    %29 = arith.addf %24, %28 : vector<16x128xf32>
    %30 = vector.extract_strided_slice %0 {offsets = [0, 20], sizes = [4, 128], strides = [1, 1]} : vector<4x256xbf16> to vector<4x128xbf16>
    %c6 = arith.constant 6 : index
    %c0_19 = arith.constant 0 : index
    %c0_20 = arith.constant 0 : index
    %31 = vector.load %arg2[%c6, %c0_19, %c0_20] : memref<9x16x4xbf16, #tpu.memory_space<vmem>>, vector<1x16x4xbf16>
    %32 = vector.shape_cast %31 : vector<1x16x4xbf16> to vector<16x4xbf16>
    %cst_21 = arith.constant dense<0.000000e+00> : vector<16x128xf32>
    %33 = tpu.matmul %32, %30, %cst_21 {dimension_numbers = #tpu.dot_dimension_numbers<[1], [0], [0], [1], [0, 0, 1, 1], [], []>} : vector<16x4xbf16>, vector<4x128xbf16>, vector<16x128xf32> -> vector<16x128xf32>
    %34 = arith.addf %29, %33 : vector<16x128xf32>
    %35 = vector.extract_strided_slice %0 {offsets = [0, 21], sizes = [4, 128], strides = [1, 1]} : vector<4x256xbf16> to vector<4x128xbf16>
    %c7 = arith.constant 7 : index
    %c0_22 = arith.constant 0 : index
    %c0_23 = arith.constant 0 : index
    %36 = vector.load %arg2[%c7, %c0_22, %c0_23] : memref<9x16x4xbf16, #tpu.memory_space<vmem>>, vector<1x16x4xbf16>
    %37 = vector.shape_cast %36 : vector<1x16x4xbf16> to vector<16x4xbf16>
    %cst_24 = arith.constant dense<0.000000e+00> : vector<16x128xf32>
    %38 = tpu.matmul %37, %35, %cst_24 {dimension_numbers = #tpu.dot_dimension_numbers<[1], [0], [0], [1], [0, 0, 1, 1], [], []>} : vector<16x4xbf16>, vector<4x128xbf16>, vector<16x128xf32> -> vector<16x128xf32>
    %39 = arith.addf %34, %38 : vector<16x128xf32>
    %40 = vector.extract_strided_slice %0 {offsets = [0, 22], sizes = [4, 128], strides = [1, 1]} : vector<4x256xbf16> to vector<4x128xbf16>
    %c8 = arith.constant 8 : index
    %c0_25 = arith.constant 0 : index
    %c0_26 = arith.constant 0 : index
    %41 = vector.load %arg2[%c8, %c0_25, %c0_26] : memref<9x16x4xbf16, #tpu.memory_space<vmem>>, vector<1x16x4xbf16>
    %42 = vector.shape_cast %41 : vector<1x16x4xbf16> to vector<16x4xbf16>
    %cst_27 = arith.constant dense<0.000000e+00> : vector<16x128xf32>
    %43 = tpu.matmul %42, %40, %cst_27 {dimension_numbers = #tpu.dot_dimension_numbers<[1], [0], [0], [1], [0, 0, 1, 1], [], []>} : vector<16x4xbf16>, vector<4x128xbf16>, vector<16x128xf32> -> vector<16x128xf32>
    %44 = arith.addf %39, %43 : vector<16x128xf32>
    %c0_28 = arith.constant 0 : index
    %c0_29 = arith.constant 0 : index
    %45 = vector.load %arg3[%c0_28, %c0_29] : memref<1x128xbf16, #tpu.memory_space<vmem>>, vector<1x128xbf16>
    %46 = arith.extf %45 : vector<1x128xbf16> to vector<1x128xf32>
    %47 = vector.broadcast %46 : vector<1x128xf32> to vector<16x128xf32>
    %48 = arith.mulf %44, %47 : vector<16x128xf32>
    %49 = arith.truncf %44 : vector<16x128xf32> to vector<16x128xbf16>
    %c0_30 = arith.constant 0 : index
    %c0_31 = arith.constant 0 : index
    %50 = vector.load %arg4[%c0_30, %c0_31] : memref<16x128xbf16, #tpu.memory_space<vmem>>, vector<16x128xbf16>
    tpu.vector_store %arg4[%c0_30, %c0_31], %49 {strides = array<i32>} : memref<16x128xbf16, #tpu.memory_space<vmem>>, vector<16x128xbf16>,
    %cst_32 = arith.constant dense<0.000000e+00> : vector<16xf32>
    %51 = vector.multi_reduction <add>, %48, %cst_32 [1] : vector<16x128xf32> to vector<16xf32>
    %c0_33 = arith.constant 0 : index
    %c0_34 = arith.constant 0 : index
    %c0_35 = arith.constant 0 : index
    %52 = vector.load %arg5[%c0_33, %c0_34, %c0_35] : memref<1x1x16xf32, #tpu.memory_space<vmem>>, vector<1x1x16xf32>
    %53 = vector.shape_cast %52 : vector<1x1x16xf32> to vector<16xf32>
    %54 = vector.shape_cast %51 : vector<16xf32> to vector<1x1x16xf32>
    tpu.vector_store %arg5[%c0_33, %c0_34, %c0_35], %54 {strides = array<i32>} : memref<1x1x16xf32, #tpu.memory_space<vmem>>, vector<1x1x16xf32>,
    %55 = arith.mulf %48, %44 : vector<16x128xf32>
    %cst_36 = arith.constant dense<0.000000e+00> : vector<16xf32>
    %56 = vector.multi_reduction <add>, %55, %cst_36 [1] : vector<16x128xf32> to vector<16xf32>
    %c0_37 = arith.constant 0 : index
    %c0_38 = arith.constant 0 : index
    %c0_39 = arith.constant 0 : index
    %57 = vector.load %arg6[%c0_37, %c0_38, %c0_39] : memref<1x1x16xf32, #tpu.memory_space<vmem>>, vector<1x1x16xf32>
    %58 = vector.shape_cast %57 : vector<1x1x16xf32> to vector<16xf32>
    %59 = vector.shape_cast %56 : vector<16xf32> to vector<1x1x16xf32>
    tpu.vector_store %arg6[%c0_37, %c0_38, %c0_39], %59 {strides = array<i32>} : memref<1x1x16xf32, #tpu.memory_space<vmem>>, vector<1x1x16xf32>,
    return
  }
  func.func @transform_0(%arg0: i32) -> (i32, i32) {
    %c0_i32 = arith.constant 0 : i32
    %c0_i32_0 = arith.constant 0 : i32
    return %c0_i32, %arg0 : i32, i32
  }
  func.func @transform_1(%arg0: i32) -> (i32, i32, i32) {
    %c0_i32 = arith.constant 0 : i32
    %c0_i32_0 = arith.constant 0 : i32
    %c0_i32_1 = arith.constant 0 : i32
    %c0_i32_2 = arith.constant 0 : i32
    return %c0_i32, %c0_i32_0, %c0_i32_1 : i32, i32, i32
  }
  func.func @transform_2(%arg0: i32) -> (i32, i32) {
    %c0_i32 = arith.constant 0 : i32
    %c0_i32_0 = arith.constant 0 : i32
    return %c0_i32, %arg0 : i32, i32
  }
  func.func @transform_3(%arg0: i32) -> (i32, i32) {
    %c0_i32 = arith.constant 0 : i32
    %c0_i32_0 = arith.constant 0 : i32
    return %c0_i32, %arg0 : i32, i32
  }
  func.func @transform_4(%arg0: i32) -> (i32, i32, i32) {
    %c0_i32 = arith.constant 0 : i32
    %c0_i32_0 = arith.constant 0 : i32
    %c0_i32_1 = arith.constant 0 : i32
    return %arg0, %c0_i32, %c0_i32_0 : i32, i32, i32
  }
  func.func @transform_5(%arg0: i32) -> (i32, i32, i32) {
    %c0_i32 = arith.constant 0 : i32
    %c0_i32_0 = arith.constant 0 : i32
    %c0_i32_1 = arith.constant 0 : i32
    return %arg0, %c0_i32, %c0_i32_0 : i32, i32, i32
  }
}

</mosaic_0001>

<llo_original>
// kernel: tile.16
$region0: #{tile.16}
  #allocation0 [shape = 's32[1]{0}', space=sflag, size = 0x4, scoped, tag = 'scoped memory for tile.16']
  %s0 = inlined_call_operand.vmem [shape: pred[100], index: 0, kind: input, shape index: {}]
  %s1 = inlined_call_operand.vmem [shape: pred[2,100], index: 1, kind: output, shape index: {}]
  // Predicated region
  $region2: #{tile.16} parent=0 // pred_check
    _
  $region3: #{tile.16} parent=0 // pred_check_branch
    %3 = sbr.rel (0) target = $region5
  $region4: #{tile.16} parent=0 // pred_region
    _
  $region5: #{tile.16} parent=0 // pred_fallthru
    _
  %v4 = vld [vmem:[%s0] ss:$0 sm:$0xff]
  %v6 = vshra.s32 %v4, 0
  %v7 = vand.u32 %v6, 255
  %v8 = vpack.c.b16 0, %v7
  %v9 = vpack.c.b8 0, %v8
  %s11 = ssub.s32 2, 1
  %12 = vst [vmem:[%s1] sm:%s11] %v9

// kernel: tile.17
$region0: #{tile.17}
  %s0 = inlined_call_operand.vmem [shape: pred[2,100], index: 0, kind: input, shape index: {}]
  %s1 = inlined_call_operand.vmem [shape: pred[200], index: 1, kind: output, shape index: {}]
  $region1: #{tile.17} parent=0
    #allocation0 [shape = 'u8[4096]{0}', space=vmem, size = 0x1000, scoped, tag = 'scoped mem for output reshape']
    #allocation1 [shape = 'u8[4096]{0}', space=vmem, size = 0x1000, scoped, tag = 'scoped mem for input reshape']
    %s3 = ssub.s32 16, 1
    %s4 = sand.u32 %s3, 15
    %p5 = scmp.ne.s32.totalorder %s4, 0
    %s6 = scalar_select %p5, 1, 0
    %s7 = sand.u32 %s3, 240
    %p8 = scmp.ne.s32.totalorder %s7, 0
    %s9 = scalar_select %p8, 2, 0
    %s10 = sor.u32 %s6, %s9
    %v11 = vld [vmem:[%s0] sm:%s10]
    %v12 = vunpack.c.0.s8 %v11
    %v13 = vunpack.c.1.s8 %v11
    %v14 = vunpack.c.2.s8 %v11
    %v15 = vunpack.c.3.s8 %v11
    %16 = vst [vmem:[#allocation1] sm:%s3] %v12
    %v17 = vld [vmem:[#allocation1] sm:$0x1]
    %vm18 = vcmask 818176
    %19 = vst.msk [vmem:[#allocation0] sm:$0x1] %vm18, %v17
    %s20 = scalar_lea.vmem [#allocation1], 1
    %v21 = vld [vmem:[%s20] sm:$0x1]
    %s22 = scalar_lea.vmem [#allocation1], 1
    %v23 = vld [vmem:[%s22] sm:$0x1]
    %vm24 = vcmask 228352
    %v25 = vsel %vm24, %v23, %v21
    %26 = vrot.lane.b32.xlu0 %v25, 100
    %v27 = vpop.permute.xlu0 %26
    %vm28 = vcmask 588800
    %s29 = scalar_lea.vmem [#allocation0], 1
    %30 = vst.msk [vmem:[%s29] sm:$0x1] %vm28, %v27
    %vm31 = vcmask 1048352
    %32 = vst.msk [vmem:[#allocation0] sm:$0x1] %vm31, %v27
    %s34 = ssub.s32 16, 1
    %v35 = vld [vmem:[#allocation0] sm:%s34]
    %s37 = ssub.s32 2, 1
    %v38 = vpack.c.b16 0, %v35
    %v39 = vpack.c.b8 0, %v38
    %40 = vst [vmem:[%s1] sm:%s37] %v39

// kernel: tile.26
$region0: #{tile.26}
  #allocation0 [shape = 's32[1]{0}', space=sflag, size = 0x4, scoped, tag = 'scoped memory for tile.26']
  %s0 = inlined_call_operand.vmem [shape: f32[4], index: 0, kind: input, shape index: {}]
  %s1 = inlined_call_operand.vmem [shape: f32[4,4], index: 1, kind: output, shape index: {}]
  // Predicated region
  $region2: #{tile.26} parent=0 // pred_check
    _
  $region3: #{tile.26} parent=0 // pred_check_branch
    %3 = sbr.rel (0) target = $region5
  $region4: #{tile.26} parent=0 // pred_region
    _
  $region5: #{tile.26} parent=0 // pred_fallthru
    _
  %v4 = vld [vmem:[%s0] ss:$0 sm:$0xff]
  %5 = vst [vmem:[%s1] sm:$0xf] %v4

// kernel: decodeconv_forward.1
$region0: #{decodeconv_forward.1}
  #allocation0 [shape = 'u32[]', space=smem, size = 0x4, offset = 0x4, fixed_abs, tag = 'smem constant byte address 0x4 - core index']
  #allocation1 [shape = 'u32[72,128]{1,0:T(1,128)}', space=vmem, size = 0x9000, scoped, tag = 'internal scratch']
  %s0 = inlined_call_operand.vmem [shape: bf16[4,512], index: 0, kind: input, shape index: {}]
  %s1 = inlined_call_operand.vmem [shape: bf16[9,16,4], index: 1, kind: input, shape index: {}]
  %s2 = inlined_call_operand.vmem [shape: bf16[1,256], index: 2, kind: input, shape index: {}]
  %s3 = inlined_call_operand.vmem [shape: bf16[16,256], index: 3, kind: output, shape index: {0}]
  %s4 = inlined_call_operand.vmem [shape: f32[2,1,16], index: 4, kind: output, shape index: {1}]
  %s5 = inlined_call_operand.vmem [shape: f32[2,1,16], index: 5, kind: output, shape index: {2}]
  %6 = xla_tuple %s3, %s4, %s5
  %s7 = sld [smem:[#allocation0]]
  $region98: #{decodeconv_forward.1} parent=0
    _
  %s9 = ssub.s32 1, %s7
  %s10 = scalar_select 0, %s9, %s7
  $region1: #{decodeconv_forward.1} parent=0
    #allocation2 [shape = 'u8[8192]{0}', space=vmem, size = 0x2000, scoped, tag = 'output window, operand 0']
    loop: start=0, step=1, limit=4
    $region2: #{decodeconv_forward.1} parent=1 // loop_pre_header
      _
    $region3: #{decodeconv_forward.1} parent=1 // loop_header
      %s12 = sphi 0, %s16
      %p13 = scmp.ge.s32.totalorder %s12, 4
      %s22 = sphi 0, %s24
      %s25 = sphi 0, %s22
      %s26 = sphi 0, %s25
      %s42 = sphi 0, %s26
      %s46 = sphi 0, %s46
      %s48 = sphi 0, %s46
      %s49 = sphi 0, %s48
      %s63 = sphi 0, %s49
      %s69 = sphi 0, %s71
      %s72 = sphi 0, %s69
      %s73 = sphi 0, %s72
      %s89 = sphi 0, %s73
      %s95 = sphi 0, %s97
      %s98 = sphi 0, %s95
      %s99 = sphi 0, %s98
      %s115 = sphi 0, %s99
      %s121 = sphi 0, %s123
      %s124 = sphi 0, %s121
      %s125 = sphi 0, %s124
      %s141 = sphi 0, %s125
      %s147 = sphi 0, %s149
      %s150 = sphi 0, %s147
      %s151 = sphi 0, %s150
      %s167 = sphi 0, %s151
    $region4: #{decodeconv_forward.1} parent=1 // loop_header_branch
      %15 = sbr.rel (%p13) target = $region8
    $region5: #{decodeconv_forward.1} parent=1 // loop_body
      %s17 = ssub.s32 %s12, 1
      %s18 = ssub.s32 %s12, 2
      %s19 = sadd.s32 %s12, 1
      %s20 = ssub.s32 %s12, %s19
      %p21 = scmp.eq.s32.totalorder %s20, 0
      %s23 = sadd.s32 %s22, 1
      %s24 = scalar_select %p21, %s22, %s23
      %p27 = pneg %p21
      %p28 = scmp.eq.s32.totalorder %s12, 1
      %p29 = por %p27, %p28
      %p30 = scmp.ne.s32.totalorder %s22, %s25
      %p31 = scmp.eq.s32.totalorder %s12, 0
      %p32 = por %p30, %p31
      %p33 = scmp.ne.s32.totalorder %s22, %s25
      %p34 = scmp.eq.s32.totalorder %s17, 1
      %p35 = por %p33, %p34
      %p36 = scmp.ne.s32.totalorder %s25, %s26
      %p37 = scmp.eq.s32.totalorder %s17, 0
      %p38 = por %p36, %p37
      %p39 = scmp.ne.s32.totalorder %s25, %s26
      %p40 = scmp.eq.s32.totalorder %s18, 1
      %p41 = por %p39, %p40
      %p43 = scmp.ne.s32.totalorder %s26, %s42
      %p44 = scmp.eq.s32.totalorder %s18, 0
      %p45 = por %p43, %p44
      %s47 = sadd.s32 %s46, 1
      %p50 = scmp.eq.s32.totalorder %s12, 1
      %p51 = scmp.ne.s32.totalorder %s46, %s48
      %p52 = scmp.eq.s32.totalorder %s12, 0
      %p53 = por %p51, %p52
      %p54 = scmp.ne.s32.totalorder %s46, %s48
      %p55 = scmp.eq.s32.totalorder %s17, 1
      %p56 = por %p54, %p55
      %p57 = scmp.ne.s32.totalorder %s48, %s49
      %p58 = scmp.eq.s32.totalorder %s17, 0
      %p59 = por %p57, %p58
      %p60 = scmp.ne.s32.totalorder %s48, %s49
      %p61 = scmp.eq.s32.totalorder %s18, 1
      %p62 = por %p60, %p61
      %p64 = scmp.ne.s32.totalorder %s49, %s63
      %p65 = scmp.eq.s32.totalorder %s18, 0
      %p66 = por %p64, %p65
      %s67 = ssub.s32 %s12, %s19
      %p68 = scmp.eq.s32.totalorder %s67, 0
      %s70 = sadd.s32 %s69, 1
      %s71 = scalar_select %p68, %s69, %s70
      %p74 = pneg %p68
      %p75 = scmp.eq.s32.totalorder %s12, 1
      %p76 = por %p74, %p75
      %p77 = scmp.ne.s32.totalorder %s69, %s72
      %p78 = scmp.eq.s32.totalorder %s12, 0
      %p79 = por %p77, %p78
      %p80 = scmp.ne.s32.totalorder %s69, %s72
      %p81 = scmp.eq.s32.totalorder %s17, 1
      %p82 = por %p80, %p81
      %p83 = scmp.ne.s32.totalorder %s72, %s73
      %p84 = scmp.eq.s32.totalorder %s17, 0
      %p85 = por %p83, %p84
      %p86 = scmp.ne.s32.totalorder %s72, %s73
      %p87 = scmp.eq.s32.totalorder %s18, 1
      %p88 = por %p86, %p87
      %p90 = scmp.ne.s32.totalorder %s73, %s89
      %p91 = scmp.eq.s32.totalorder %s18, 0
      %p92 = por %p90, %p91
      %s93 = ssub.s32 %s12, %s19
      %p94 = scmp.eq.s32.totalorder %s93, 0
      %s96 = sadd.s32 %s95, 1
      %s97 = scalar_select %p94, %s95, %s96
      %p100 = pneg %p94
      %p101 = scmp.eq.s32.totalorder %s12, 1
      %p102 = por %p100, %p101
      %p103 = scmp.ne.s32.totalorder %s95, %s98
      %p104 = scmp.eq.s32.totalorder %s12, 0
      %p105 = por %p103, %p104
      %p106 = scmp.ne.s32.totalorder %s95, %s98
      %p107 = scmp.eq.s32.totalorder %s17, 1
      %p108 = por %p106, %p107
      %p109 = scmp.ne.s32.totalorder %s98, %s99
      %p110 = scmp.eq.s32.totalorder %s17, 0
      %p111 = por %p109, %p110
      %p112 = scmp.ne.s32.totalorder %s98, %s99
      %p113 = scmp.eq.s32.totalorder %s18, 1
      %p114 = por %p112, %p113
      %p116 = scmp.ne.s32.totalorder %s99, %s115
      %p117 = scmp.eq.s32.totalorder %s18, 0
      %p118 = por %p116, %p117
      %s119 = ssub.s32 %s12, %s19
      %p120 = scmp.eq.s32.totalorder %s119, 0
      %s122 = sadd.s32 %s121, 1
      %s123 = scalar_select %p120, %s121, %s122
      %p126 = pneg %p120
      %p127 = scmp.eq.s32.totalorder %s12, 1
      %p128 = por %p126, %p127
      %p129 = scmp.ne.s32.totalorder %s121, %s124
      %p130 = scmp.eq.s32.totalorder %s12, 0
      %p131 = por %p129, %p130
      %p132 = scmp.ne.s32.totalorder %s121, %s124
      %p133 = scmp.eq.s32.totalorder %s17, 1
      %p134 = por %p132, %p133
      %p135 = scmp.ne.s32.totalorder %s124, %s125
      %p136 = scmp.eq.s32.totalorder %s17, 0
      %p137 = por %p135, %p136
      %p138 = scmp.ne.s32.totalorder %s124, %s125
      %p139 = scmp.eq.s32.totalorder %s18, 1
      %p140 = por %p138, %p139
      %p142 = scmp.ne.s32.totalorder %s125, %s141
      %p143 = scmp.eq.s32.totalorder %s18, 0
      %p144 = por %p142, %p143
      %s145 = ssub.s32 %s12, %s19
      %p146 = scmp.eq.s32.totalorder %s145, 0
      %s148 = sadd.s32 %s147, 1
      %s149 = scalar_select %p146, %s147, %s148
      %p152 = pneg %p146
      %p153 = scmp.eq.s32.totalorder %s12, 1
      %p154 = por %p152, %p153
      %p155 = scmp.ne.s32.totalorder %s147, %s150
      %p156 = scmp.eq.s32.totalorder %s12, 0
      %p157 = por %p155, %p156
      %p158 = scmp.ne.s32.totalorder %s147, %s150
      %p159 = scmp.eq.s32.totalorder %s17, 1
      %p160 = por %p158, %p159
      %p161 = scmp.ne.s32.totalorder %s150, %s151
      %p162 = scmp.eq.s32.totalorder %s17, 0
      %p163 = por %p161, %p162
      %p164 = scmp.ne.s32.totalorder %s150, %s151
      %p165 = scmp.eq.s32.totalorder %s18, 1
      %p166 = por %p164, %p165
      %p168 = scmp.ne.s32.totalorder %s151, %s167
      %p169 = scmp.eq.s32.totalorder %s18, 0
      %p170 = por %p168, %p169
      %p171 = scmp.le.s32.totalorder 1, %s12
      %p172 = scmp.lt.s32.totalorder %s12, 3
      %p173 = pnand %p171, %p172
      %p174 = pneg %p173
      // Predicated region
      $region9: #{decodeconv_forward.1} parent=5 // pred_check
        _
      $region10: #{decodeconv_forward.1} parent=5 // pred_check_branch
        %176 = sbr.rel (%p173) target = $region12
      $region11: #{decodeconv_forward.1} parent=5 // pred_region
        %s177 = ssub.s32 %s12, 1
        // Predicated region
        $region13: #{decodeconv_forward.1} parent=11 // pred_check
          %p178 = pneg %p59
        $region14: #{decodeconv_forward.1} parent=11 // pred_check_branch
          %180 = sbr.rel (%p178) target = $region16
        $region15: #{decodeconv_forward.1} parent=11 // pred_region
          _
        $region16: #{decodeconv_forward.1} parent=11 // pred_fallthru
          _
      $region12: #{decodeconv_forward.1} parent=5 // pred_fallthru
        _
      %p181 = scmp.lt.s32.totalorder %s12, 2
      // Predicated region
      $region17: #{decodeconv_forward.1} parent=5 // pred_check
        %p182 = pneg %p181
      $region18: #{decodeconv_forward.1} parent=5 // pred_check_branch
        %184 = sbr.rel (%p182) target = $region20
      $region19: #{decodeconv_forward.1} parent=5 // pred_region
        // Predicated region
        $region21: #{decodeconv_forward.1} parent=19 // pred_check
          %p185 = pneg %p32
        $region22: #{decodeconv_forward.1} parent=19 // pred_check_branch
          %187 = sbr.rel (%p185) target = $region24
        $region23: #{decodeconv_forward.1} parent=19 // pred_region
          %s188 = smul.u32 2, %s12
          %p189 = scmp.lt.s32.totalorder %s188, 3
          %s190 = scalar_select %p189, %s188, 3
          %s191 = smul.addr %s190, 2
          %s192 = scalar_lea.vmem %s0, %s191
          %s193 = smul.u32 2, %s12
        $region24: #{decodeconv_forward.1} parent=19 // pred_fallthru
          _
        // Predicated region
        $region25: #{decodeconv_forward.1} parent=19 // pred_check
          %p194 = pneg %p79
        $region26: #{decodeconv_forward.1} parent=19 // pred_check_branch
          %196 = sbr.rel (%p194) target = $region28
        $region27: #{decodeconv_forward.1} parent=19 // pred_region
          %p197 = scmp.lt.s32.totalorder %s12, 1
          %s198 = scalar_select %p197, %s12, 1
          %s199 = scalar_lea.vmem %s2, %s198
        $region28: #{decodeconv_forward.1} parent=19 // pred_fallthru
          _
      $region20: #{decodeconv_forward.1} parent=5 // pred_fallthru
        _
      %p200 = scmp.le.s32.totalorder 1, %s12
      %p201 = scmp.lt.s32.totalorder %s12, 3
      %p202 = pnand %p200, %p201
      %p203 = pneg %p202
      // Predicated region
      $region29: #{decodeconv_forward.1} parent=5 // pred_check
        _
      $region30: #{decodeconv_forward.1} parent=5 // pred_check_branch
        %205 = sbr.rel (%p202) target = $region32
      $region31: #{decodeconv_forward.1} parent=5 // pred_region
        %s206 = ssub.s32 %s12, 1
        %s207 = smul.u32 2, %s17
        %p208 = scmp.lt.s32.totalorder %s207, 3
        %s209 = scalar_select %p208, %s207, 3
        %s210 = smul.addr %s209, 2
        %s211 = scalar_lea.vmem %s0, %s210
        %p212 = pneg %p38
        %p213 = pneg %p35
        %p214 = pneg %p59
        %p215 = pneg %p56
        %p216 = scmp.lt.s32.totalorder %s17, 1
        %s217 = scalar_select %p216, %s17, 1
        %s218 = scalar_lea.vmem %s2, %s217
        %p219 = pneg %p85
        %p220 = pneg %p82
        %p221 = pneg %p111
        %p222 = pneg %p108
        %s223 = sand.u32 %s98, 1
        %s224 = sand.u32 %s98, 1
        %s225 = smul.addr %s224, 8
        %s226 = scalar_lea.vmem [#allocation2], %s225
        %p227 = pneg %p137
        %p228 = pneg %p134
        %p229 = scmp.lt.s32.totalorder %s17, 1
        %s230 = scalar_select %p229, %s17, 1
        %s231 = scalar_lea.vmem %s4, %s230
        %p232 = pneg %p163
        %p233 = pneg %p160
        %p234 = scmp.lt.s32.totalorder %s17, 1
        %s235 = scalar_select %p234, %s17, 1
        %s236 = scalar_lea.vmem %s5, %s235
        %s237 = smul.u32 2, %s17
        %p238 = scmp.lt.s32.totalorder %s237, 3
        %s239 = scalar_select %p238, %s237, 3
        %s240 = smul.addr %s239, 2
        %s241 = scalar_lea.vmem %s0, %s240
        %s242 = smul.u32 2, %s17
        %p243 = scmp.lt.s32.totalorder %s17, 1
        %s244 = scalar_select %p243, %s17, 1
        %s245 = scalar_lea.vmem %s2, %s244
        %p246 = scmp.lt.s32.totalorder %s17, 1
        %s247 = scalar_select %p246, %s17, 1
        %s248 = scalar_lea.vmem %s4, %s247
        %p249 = scmp.lt.s32.totalorder %s17, 1
        %s250 = scalar_select %p249, %s17, 1
        %s251 = scalar_lea.vmem %s5, %s250
        %v253 = vld [vmem:[%s241] sm:$0xf]
        %v254 = vld [vmem:[%s1] sm:$0xf]
        %v255 = vld [vmem:[%s1 + $0x4] sm:$0xf]
        %s256 = scalar_lea.vmem %s1, 8
        %v257 = vld [vmem:[%s256] sm:$0xf]
        %v258 = vld [vmem:[%s256 + $0x4] sm:$0xf]
        %v261 = vunpack.c.l.b16 %v257
        %v262 = vunpack.c.l.b16 %v258
        %v263 = vpack.c.b16 %v262, %v261
        %265 = vst [vmem:[#allocation1] ss:$4 sm:$0xff] %v253
        %v266 = vld.sshfl [vmem:[#allocation1] sm:$0xff pattern:$0x73625140]
        %v268 = vld.sshfl [vmem:[#allocation1 + $0x8] sm:$0xff pattern:$0x73625140]
        %270 = vrot.lane.b32.xlu0 %v266, 127
        %v271 = vpop.permute.xlu0 %270
        %272 = vrot.lane.b32.xlu0 %v268, 127
        %v273 = vpop.permute.xlu0 %272
        %vm274 = vcmask 1039360
        %v275 = vsel %vm274, %v271, %v273
        %vm276 = vcmask 31744
        %v278 = vsel %vm276, %v263, 0
        %vm280 = vcmask 1041408
        %v282 = vsel %vm280, %v275, 0
        %284 = vmatpush.bf16.msra.mxu0 0
        %285 = vmatpush.bf16.msra.mxu0 0
        %286 = vmatpush.bf16.msra.mxu0 0
        %287 = vmatpush.bf16.msra.mxu0 0
        %288 = vmatpush.bf16.msra.mxu0 0
        %289 = vmatpush.bf16.msra.mxu0 0
        %290 = vmatpush.bf16.msra.mxu0 0
        %291 = vmatpush.bf16.msra.mxu0 %v282
        %292 = vmatmul.bf16.gmra.mxu0 %v278
        %v293 = vpop.f32.mrf.mxu0
        %v294 = vadd.f32 0.0, %v293
        %v295 = vpop.f32.mrf.mxu0
        %v296 = vadd.f32 0.0, %v295
        %297 = vdwg.mxu0
        %v300 = vunpack.c.l.b16 %v254
        %v301 = vunpack.c.l.b16 %v255
        %v302 = vpack.c.b16 %v301, %v300
        %v304 = vsel %vm276, %v302, 0
        %v306 = vsel %vm280, %v253, 0
        %308 = vmatpush.bf16.msra.mxu0 0
        %309 = vmatpush.bf16.msra.mxu0 0
        %310 = vmatpush.bf16.msra.mxu0 0
        %311 = vmatpush.bf16.msra.mxu0 0
        %312 = vmatpush.bf16.msra.mxu0 0
        %313 = vmatpush.bf16.msra.mxu0 0
        %314 = vmatpush.bf16.msra.mxu0 0
        %315 = vmatpush.bf16.msra.mxu0 %v306
        %316 = vmatmul.bf16.gmra.mxu0 %v304
        %v317 = vpop.f32.mrf.mxu0
        %v318 = vadd.f32 %v294, %v317
        %v319 = vpop.f32.mrf.mxu0
        %v320 = vadd.f32 %v296, %v319
        %321 = vdwg.mxu0
        %s322 = scalar_lea.vmem %s1, 16
        %v323 = vld [vmem:[%s322] sm:$0xf]
        %v324 = vld [vmem:[%s322 + $0x4] sm:$0xf]
        %v327 = vunpack.c.l.b16 %v323
        %v328 = vunpack.c.l.b16 %v324
        %v329 = vpack.c.b16 %v328, %v327
        %330 = vst [vmem:[#allocation1] ss:$4 sm:$0xff] %v253
        %v331 = vld.sshfl [vmem:[#allocation1] sm:$0xff pattern:$0x73625140]
        %v333 = vld.sshfl [vmem:[#allocation1 + $0x8] sm:$0xff pattern:$0x73625140]
        %335 = vrot.lane.b32.xlu0 %v331, 126
        %v336 = vpop.permute.xlu0 %335
        %337 = vrot.lane.b32.xlu0 %v333, 126
        %v338 = vpop.permute.xlu0 %337
        %vm339 = vcmask 1031168
        %v340 = vsel %vm339, %v336, %v338
        %v342 = vsel %vm276, %v329, 0
        %v345 = vsel %vm280, %v340, 0
        %347 = vmatpush.bf16.msra.mxu0 0
        %348 = vmatpush.bf16.msra.mxu0 0
        %349 = vmatpush.bf16.msra.mxu0 0
        %350 = vmatpush.bf16.msra.mxu0 0
        %351 = vmatpush.bf16.msra.mxu0 0
        %352 = vmatpush.bf16.msra.mxu0 0
        %353 = vmatpush.bf16.msra.mxu0 0
        %354 = vmatpush.bf16.msra.mxu0 %v345
        %355 = vmatmul.bf16.gmra.mxu0 %v342
        %v356 = vpop.f32.mrf.mxu0
        %v357 = vadd.f32 0.0, %v356
        %v358 = vpop.f32.mrf.mxu0
        %v359 = vadd.f32 0.0, %v358
        %360 = vdwg.mxu0
        %v361 = vadd.f32 %v318, %v357
        %v362 = vadd.f32 %v320, %v359
        %s363 = scalar_lea.vmem %s1, 24
        %v364 = vld [vmem:[%s363] sm:$0xf]
        %v365 = vld [vmem:[%s363 + $0x4] sm:$0xf]
        %v368 = vunpack.c.l.b16 %v364
        %v369 = vunpack.c.l.b16 %v365
        %v370 = vpack.c.b16 %v369, %v368
        %371 = vst [vmem:[#allocation1] ss:$4 sm:$0xff] %v253
        %v372 = vld.sshfl [vmem:[#allocation1] sm:$0xff pattern:$0x73625140]
        %v374 = vld.sshfl [vmem:[#allocation1 + $0x8] sm:$0xff pattern:$0x73625140]
        %376 = vrot.lane.b32.xlu0 %v372, 118
        %v377 = vpop.permute.xlu0 %376
        %378 = vrot.lane.b32.xlu0 %v374, 118
        %v379 = vpop.permute.xlu0 %378
        %vm380 = vcmask 965632
        %v381 = vsel %vm380, %v377, %v379
        %v383 = vsel %vm276, %v370, 0
        %v386 = vsel %vm280, %v381, 0
        %388 = vmatpush.bf16.msra.mxu0 0
        %389 = vmatpush.bf16.msra.mxu0 0
        %390 = vmatpush.bf16.msra.mxu0 0
        %391 = vmatpush.bf16.msra.mxu0 0
        %392 = vmatpush.bf16.msra.mxu0 0
        %393 = vmatpush.bf16.msra.mxu0 0
        %394 = vmatpush.bf16.msra.mxu0 0
        %395 = vmatpush.bf16.msra.mxu0 %v386
        %396 = vmatmul.bf16.gmra.mxu0 %v383
        %v397 = vpop.f32.mrf.mxu0
        %v398 = vadd.f32 0.0, %v397
        %v399 = vpop.f32.mrf.mxu0
        %v400 = vadd.f32 0.0, %v399
        %401 = vdwg.mxu0
        %v402 = vadd.f32 %v361, %v398
        %v403 = vadd.f32 %v362, %v400
        %s404 = scalar_lea.vmem %s1, 32
        %v405 = vld [vmem:[%s404] sm:$0xf]
        %v406 = vld [vmem:[%s404 + $0x4] sm:$0xf]
        %v409 = vunpack.c.l.b16 %v405
        %v410 = vunpack.c.l.b16 %v406
        %v411 = vpack.c.b16 %v410, %v409
        %412 = vst [vmem:[#allocation1] ss:$4 sm:$0xff] %v253
        %v413 = vld.sshfl [vmem:[#allocation1] sm:$0xff pattern:$0x73625140]
        %v415 = vld.sshfl [vmem:[#allocation1 + $0x8] sm:$0xff pattern:$0x73625140]
        %417 = vrot.lane.b32.xlu0 %v413, 117
        %v418 = vpop.permute.xlu0 %417
        %419 = vrot.lane.b32.xlu0 %v415, 117
        %v420 = vpop.permute.xlu0 %419
        %vm421 = vcmask 957440
        %v422 = vsel %vm421, %v418, %v420
        %v424 = vsel %vm276, %v411, 0
        %v427 = vsel %vm280, %v422, 0
        %429 = vmatpush.bf16.msra.mxu0 0
        %430 = vmatpush.bf16.msra.mxu0 0
        %431 = vmatpush.bf16.msra.mxu0 0
        %432 = vmatpush.bf16.msra.mxu0 0
        %433 = vmatpush.bf16.msra.mxu0 0
        %434 = vmatpush.bf16.msra.mxu0 0
        %435 = vmatpush.bf16.msra.mxu0 0
        %436 = vmatpush.bf16.msra.mxu0 %v427
        %437 = vmatmul.bf16.gmra.mxu0 %v424
        %v438 = vpop.f32.mrf.mxu0
        %v439 = vadd.f32 0.0, %v438
        %v440 = vpop.f32.mrf.mxu0
        %v441 = vadd.f32 0.0, %v440
        %442 = vdwg.mxu0
        %v443 = vadd.f32 %v402, %v439
        %v444 = vadd.f32 %v403, %v441
        %s445 = scalar_lea.vmem %s1, 40
        %v446 = vld [vmem:[%s445] sm:$0xf]
        %v447 = vld [vmem:[%s445 + $0x4] sm:$0xf]
        %v450 = vunpack.c.l.b16 %v446
        %v451 = vunpack.c.l.b16 %v447
        %v452 = vpack.c.b16 %v451, %v450
        %453 = vst [vmem:[#allocation1] ss:$4 sm:$0xff] %v253
        %v454 = vld.sshfl [vmem:[#allocation1] sm:$0xff pattern:$0x73625140]
        %v456 = vld.sshfl [vmem:[#allocation1 + $0x8] sm:$0xff pattern:$0x73625140]
        %458 = vrot.lane.b32.xlu0 %v454, 116
        %v459 = vpop.permute.xlu0 %458
        %460 = vrot.lane.b32.xlu0 %v456, 116
        %v461 = vpop.permute.xlu0 %460
        %vm462 = vcmask 949248
        %v463 = vsel %vm462, %v459, %v461
        %v465 = vsel %vm276, %v452, 0
        %v468 = vsel %vm280, %v463, 0
        %470 = vmatpush.bf16.msra.mxu0 0
        %471 = vmatpush.bf16.msra.mxu0 0
        %472 = vmatpush.bf16.msra.mxu0 0
        %473 = vmatpush.bf16.msra.mxu0 0
        %474 = vmatpush.bf16.msra.mxu0 0
        %475 = vmatpush.bf16.msra.mxu0 0
        %476 = vmatpush.bf16.msra.mxu0 0
        %477 = vmatpush.bf16.msra.mxu0 %v468
        %478 = vmatmul.bf16.gmra.mxu0 %v465
        %v479 = vpop.f32.mrf.mxu0
        %v480 = vadd.f32 0.0, %v479
        %v481 = vpop.f32.mrf.mxu0
        %v482 = vadd.f32 0.0, %v481
        %483 = vdwg.mxu0
        %v484 = vadd.f32 %v443, %v480
        %v485 = vadd.f32 %v444, %v482
        %s486 = scalar_lea.vmem %s1, 48
        %v487 = vld [vmem:[%s486] sm:$0xf]
        %v488 = vld [vmem:[%s486 + $0x4] sm:$0xf]
        %v491 = vunpack.c.l.b16 %v487
        %v492 = vunpack.c.l.b16 %v488
        %v493 = vpack.c.b16 %v492, %v491
        %494 = vst [vmem:[#allocation1] ss:$4 sm:$0xff] %v253
        %v495 = vld.sshfl [vmem:[#allocation1] sm:$0xff pattern:$0x73625140]
        %v497 = vld.sshfl [vmem:[#allocation1 + $0x8] sm:$0xff pattern:$0x73625140]
        %499 = vrot.lane.b32.xlu0 %v495, 108
        %v500 = vpop.permute.xlu0 %499
        %501 = vrot.lane.b32.xlu0 %v497, 108
        %v502 = vpop.permute.xlu0 %501
        %vm503 = vcmask 883712
        %v504 = vsel %vm503, %v500, %v502
        %v506 = vsel %vm276, %v493, 0
        %v509 = vsel %vm280, %v504, 0
        %511 = vmatpush.bf16.msra.mxu0 0
        %512 = vmatpush.bf16.msra.mxu0 0
        %513 = vmatpush.bf16.msra.mxu0 0
        %514 = vmatpush.bf16.msra.mxu0 0
        %515 = vmatpush.bf16.msra.mxu0 0
        %516 = vmatpush.bf16.msra.mxu0 0
        %517 = vmatpush.bf16.msra.mxu0 0
        %518 = vmatpush.bf16.msra.mxu0 %v509
        %519 = vmatmul.bf16.gmra.mxu0 %v506
        %v520 = vpop.f32.mrf.mxu0
        %v521 = vadd.f32 0.0, %v520
        %v522 = vpop.f32.mrf.mxu0
        %v523 = vadd.f32 0.0, %v522
        %524 = vdwg.mxu0
        %v525 = vadd.f32 %v484, %v521
        %v526 = vadd.f32 %v485, %v523
        %s527 = scalar_lea.vmem %s1, 56
        %v528 = vld [vmem:[%s527] sm:$0xf]
        %v529 = vld [vmem:[%s527 + $0x4] sm:$0xf]
        %v532 = vunpack.c.l.b16 %v528
        %v533 = vunpack.c.l.b16 %v529
        %v534 = vpack.c.b16 %v533, %v532
        %535 = vst [vmem:[#allocation1] ss:$4 sm:$0xff] %v253
        %v536 = vld.sshfl [vmem:[#allocation1] sm:$0xff pattern:$0x73625140]
        %v538 = vld.sshfl [vmem:[#allocation1 + $0x8] sm:$0xff pattern:$0x73625140]
        %540 = vrot.lane.b32.xlu0 %v536, 107
        %v541 = vpop.permute.xlu0 %540
        %542 = vrot.lane.b32.xlu0 %v538, 107
        %v543 = vpop.permute.xlu0 %542
        %vm544 = vcmask 875520
        %v545 = vsel %vm544, %v541, %v543
        %v547 = vsel %vm276, %v534, 0
        %v550 = vsel %vm280, %v545, 0
        %552 = vmatpush.bf16.msra.mxu0 0
        %553 = vmatpush.bf16.msra.mxu0 0
        %554 = vmatpush.bf16.msra.mxu0 0
        %555 = vmatpush.bf16.msra.mxu0 0
        %556 = vmatpush.bf16.msra.mxu0 0
        %557 = vmatpush.bf16.msra.mxu0 0
        %558 = vmatpush.bf16.msra.mxu0 0
        %559 = vmatpush.bf16.msra.mxu0 %v550
        %560 = vmatmul.bf16.gmra.mxu0 %v547
        %v561 = vpop.f32.mrf.mxu0
        %v562 = vadd.f32 0.0, %v561
        %v563 = vpop.f32.mrf.mxu0
        %v564 = vadd.f32 0.0, %v563
        %565 = vdwg.mxu0
        %v566 = vadd.f32 %v525, %v562
        %v567 = vadd.f32 %v526, %v564
        %s568 = scalar_lea.vmem %s1, 64
        %v569 = vld [vmem:[%s568] sm:$0xf]
        %v570 = vld [vmem:[%s568 + $0x4] sm:$0xf]
        %v573 = vunpack.c.l.b16 %v569
        %v574 = vunpack.c.l.b16 %v570
        %v575 = vpack.c.b16 %v574, %v573
        %576 = vst [vmem:[#allocation1] ss:$4 sm:$0xff] %v253
        %v577 = vld.sshfl [vmem:[#allocation1] sm:$0xff pattern:$0x73625140]
        %v579 = vld.sshfl [vmem:[#allocation1 + $0x8] sm:$0xff pattern:$0x73625140]
        %581 = vrot.lane.b32.xlu0 %v577, 106
        %v582 = vpop.permute.xlu0 %581
        %583 = vrot.lane.b32.xlu0 %v579, 106
        %v584 = vpop.permute.xlu0 %583
        %vm585 = vcmask 867328
        %v586 = vsel %vm585, %v582, %v584
        %v588 = vsel %vm276, %v575, 0
        %v591 = vsel %vm280, %v586, 0
        %593 = vmatpush.bf16.msra.mxu0 0
        %594 = vmatpush.bf16.msra.mxu0 0
        %595 = vmatpush.bf16.msra.mxu0 0
        %596 = vmatpush.bf16.msra.mxu0 0
        %597 = vmatpush.bf16.msra.mxu0 0
        %598 = vmatpush.bf16.msra.mxu0 0
        %599 = vmatpush.bf16.msra.mxu0 0
        %600 = vmatpush.bf16.msra.mxu0 %v591
        %601 = vmatmul.bf16.gmra.mxu0 %v588
        %v602 = vpop.f32.mrf.mxu0
        %v603 = vadd.f32 0.0, %v602
        %v604 = vpop.f32.mrf.mxu0
        %v605 = vadd.f32 0.0, %v604
        %606 = vdwg.mxu0
        %v607 = vadd.f32 %v566, %v603
        %v608 = vadd.f32 %v567, %v605
        %v609 = vld [vmem:[%s245] sm:$0x1]
        %v610 = vunpack.c.l.bf16 %v609
        %v611 = vperm.slane %v610, 0
        %v612 = vmul.f32 %v607, %v611
        %v613 = vmul.f32 %v608, %v611
        %v614 = vpack.c.bf16 %v607, %v607
        %v615 = vpack.c.bf16 %v608, %v608
        %616 = vst [vmem:[%s226] sm:$0xf] %v614
        %617 = vst [vmem:[%s226 + $0x4] sm:$0xf] %v615
        %618 = vadd.xlane.f32.xlu0 %v612
        %v619 = vpop.xlane.xlu0 %618
        %620 = vadd.xlane.f32.xlu0 %v613
        %v621 = vpop.xlane.xlu0 %620
        %v624 = vlaneseq
        %v625 = vand.u32 %v624, 127
        %v626 = vperm.slane %v619, %v625
        %v627 = vadd.s32 %v625, 4294967288
        %v628 = vperm.slane %v621, %v627
        %vm629 = vcmask 130112
        %v630 = vsel %vm629, %v628, %v626
        %vm632 = vcmask 122880
        %633 = vst.msk [vmem:[%s248] sm:$0x1] %vm632, %v630
        %v634 = vmul.f32 %v612, %v607
        %v635 = vmul.f32 %v613, %v608
        %636 = vadd.xlane.f32.xlu0 %v634
        %v637 = vpop.xlane.xlu0 %636
        %638 = vadd.xlane.f32.xlu0 %v635
        %v639 = vpop.xlane.xlu0 %638
        %v642 = vperm.slane %v637, %v625
        %v643 = vperm.slane %v639, %v627
        %v644 = vsel %vm629, %v643, %v642
        %646 = vst.msk [vmem:[%s251] sm:$0x1] %vm632, %v644
        %s647 = sand.u32 %s98, 1
        %s648 = sand.u32 %s98, 1
        %s649 = smul.addr %s648, 8
        %s650 = scalar_lea.vmem [#allocation2], %s649
        %p651 = scmp.lt.s32.totalorder %s17, 1
        %s652 = scalar_select %p651, %s17, 1
        %s653 = scalar_lea.vmem %s4, %s652
        %p654 = scmp.lt.s32.totalorder %s17, 1
        %s655 = scalar_select %p654, %s17, 1
        %s656 = scalar_lea.vmem %s5, %s655
        // Predicated region
        $region33: #{decodeconv_forward.1} parent=31 // pred_check
          %p657 = pneg %p108
        $region34: #{decodeconv_forward.1} parent=31 // pred_check_branch
          %659 = sbr.rel (%p657) target = $region36
        $region35: #{decodeconv_forward.1} parent=31 // pred_region
          %s660 = smul.addr %s17, 4
          %s661 = scalar_lea.vmem %s3, %s660
          // Predicated region
          $region37: #{decodeconv_forward.1} parent=35 // pred_check
            _
          $region38: #{decodeconv_forward.1} parent=35 // pred_check_branch
            %663 = sbr.rel (0) target = $region40
          $region39: #{decodeconv_forward.1} parent=35 // pred_region
            // Predicated region
            $region41: #{decodeconv_forward.1} parent=39 // pred_check
              _
            $region42: #{decodeconv_forward.1} parent=39 // pred_check_branch
              %665 = sbr.rel target = $region44
            $region43: #{decodeconv_forward.1} parent=39 // pred_region
              // Predicated region
              $region56: #{decodeconv_forward.1} parent=43 // pred_check
                _
              $region57: #{decodeconv_forward.1} parent=43 // pred_check_branch
                %683 = sbr.rel (0) target = $region59
              $region58: #{decodeconv_forward.1} parent=43 // pred_region
                loop: start=0, step=1, limit=1
                $region60: #{decodeconv_forward.1} parent=58 // loop_pre_header
                  _
                $region61: #{decodeconv_forward.1} parent=58 // loop_header
                  %s685 = sphi 0, %s689
                  %p686 = scmp.ge.s32.totalorder %s685, 1
                  %s690 = sphi %s650, %s650
                  %s691 = sphi %s661, %s661
                $region62: #{decodeconv_forward.1} parent=58 // loop_header_branch
                  %688 = sbr.rel (%p686) target = $region66
                $region63: #{decodeconv_forward.1} parent=58 // loop_body
                  _
                $region64: #{decodeconv_forward.1} parent=58 // loop_footer
                  %s689 = sadd.s32 1, %s685
                $region65: #{decodeconv_forward.1} parent=58 // loop_footer_branch
                  %684 = sbr.rel target = $region61
                $region66: #{decodeconv_forward.1} parent=58 // loop_exit
                  _
                %s693 = ssub.s32 16, 1
                loop: start=0, step=1, limit=1
                $region67: #{decodeconv_forward.1} parent=58 // loop_pre_header
                  _
                $region68: #{decodeconv_forward.1} parent=58 // loop_header
                  %s695 = sphi 0, %s699
                  %p696 = scmp.ge.s32.totalorder %s695, 1
                  %s700 = sphi %s650, %s650
                  %s701 = sphi %s661, %s661
                $region69: #{decodeconv_forward.1} parent=58 // loop_header_branch
                  %698 = sbr.rel (%p696) target = $region73
                $region70: #{decodeconv_forward.1} parent=58 // loop_body
                  %v702 = vld [vmem:[%s700] sm:%s693]
                  %703 = vst [vmem:[%s701] sm:%s693] %v702
                  %v704 = vld [vmem:[%s700 + $0x4] sm:%s693]
                  %705 = vst [vmem:[%s701 + $0x8] sm:%s693] %v704
                $region71: #{decodeconv_forward.1} parent=58 // loop_footer
                  %s699 = sadd.s32 1, %s695
                $region72: #{decodeconv_forward.1} parent=58 // loop_footer_branch
                  %694 = sbr.rel target = $region68
                $region73: #{decodeconv_forward.1} parent=58 // loop_exit
                  _
              $region59: #{decodeconv_forward.1} parent=43 // pred_fallthru
                _
            $region44: #{decodeconv_forward.1} parent=39 // pred_fallthru
              _
            // Predicated region
            $region45: #{decodeconv_forward.1} parent=39 // pred_check
              _
            $region46: #{decodeconv_forward.1} parent=39 // pred_check_branch
              %667 = sbr.rel (0) target = $region48
            $region47: #{decodeconv_forward.1} parent=39 // pred_region
              %s669 = ssub.s32 16, 1
              loop: start=0, step=1, limit=1
              $region49: #{decodeconv_forward.1} parent=47 // loop_pre_header
                _
              $region50: #{decodeconv_forward.1} parent=47 // loop_header
                %s671 = sphi 0, %s675
                %p672 = scmp.ge.s32.totalorder %s671, 1
                %s676 = sphi %s650, %s650
                %s677 = sphi %s661, %s661
              $region51: #{decodeconv_forward.1} parent=47 // loop_header_branch
                %674 = sbr.rel (%p672) target = $region55
              $region52: #{decodeconv_forward.1} parent=47 // loop_body
                %v678 = vld [vmem:[%s676] sm:%s669]
                %679 = vst [vmem:[%s677] sm:%s669] %v678
                %v680 = vld [vmem:[%s676 + $0x4] sm:%s669]
                %681 = vst [vmem:[%s677 + $0x8] sm:%s669] %v680
              $region53: #{decodeconv_forward.1} parent=47 // loop_footer
                %s675 = sadd.s32 1, %s671
              $region54: #{decodeconv_forward.1} parent=47 // loop_footer_branch
                %670 = sbr.rel target = $region50
              $region55: #{decodeconv_forward.1} parent=47 // loop_exit
                _
            $region48: #{decodeconv_forward.1} parent=39 // pred_fallthru
              _
          $region40: #{decodeconv_forward.1} parent=35 // pred_fallthru
            _
          %706 = vnop
        $region36: #{decodeconv_forward.1} parent=31 // pred_fallthru
          _
        // Predicated region
        $region74: #{decodeconv_forward.1} parent=31 // pred_check
          %p707 = pneg %p134
        $region75: #{decodeconv_forward.1} parent=31 // pred_check_branch
          %709 = sbr.rel (%p707) target = $region77
        $region76: #{decodeconv_forward.1} parent=31 // pred_region
          _
        $region77: #{decodeconv_forward.1} parent=31 // pred_fallthru
          _
        // Predicated region
        $region78: #{decodeconv_forward.1} parent=31 // pred_check
          %p710 = pneg %p160
        $region79: #{decodeconv_forward.1} parent=31 // pred_check_branch
          %712 = sbr.rel (%p710) target = $region81
        $region80: #{decodeconv_forward.1} parent=31 // pred_region
          _
        $region81: #{decodeconv_forward.1} parent=31 // pred_fallthru
          _
      $region32: #{decodeconv_forward.1} parent=5 // pred_fallthru
        _
      %p713 = scmp.le.s32.totalorder 2, %s12
      // Predicated region
      $region82: #{decodeconv_forward.1} parent=5 // pred_check
        %p714 = pneg %p713
      $region83: #{decodeconv_forward.1} parent=5 // pred_check_branch
        %716 = sbr.rel (%p714) target = $region85
      $region84: #{decodeconv_forward.1} parent=5 // pred_region
        %s717 = ssub.s32 %s12, 2
        // Predicated region
        $region86: #{decodeconv_forward.1} parent=84 // pred_check
          %p718 = pneg %p114
        $region87: #{decodeconv_forward.1} parent=84 // pred_check_branch
          %720 = sbr.rel (%p718) target = $region89
        $region88: #{decodeconv_forward.1} parent=84 // pred_region
          %s721 = sand.u32 %s99, 1
          %s722 = sand.u32 %s99, 1
          %s723 = smul.addr %s722, 8
          %s724 = scalar_lea.vmem [#allocation2], %s723
        $region89: #{decodeconv_forward.1} parent=84 // pred_fallthru
          _
        // Predicated region
        $region90: #{decodeconv_forward.1} parent=84 // pred_check
          %p725 = pneg %p140
        $region91: #{decodeconv_forward.1} parent=84 // pred_check_branch
          %727 = sbr.rel (%p725) target = $region93
        $region92: #{decodeconv_forward.1} parent=84 // pred_region
          %p728 = scmp.lt.s32.totalorder %s18, 1
          %s729 = scalar_select %p728, %s18, 1
          %s730 = scalar_lea.vmem %s4, %s729
        $region93: #{decodeconv_forward.1} parent=84 // pred_fallthru
          _
        // Predicated region
        $region94: #{decodeconv_forward.1} parent=84 // pred_check
          %p731 = pneg %p166
        $region95: #{decodeconv_forward.1} parent=84 // pred_check_branch
          %733 = sbr.rel (%p731) target = $region97
        $region96: #{decodeconv_forward.1} parent=84 // pred_region
          %p734 = scmp.lt.s32.totalorder %s18, 1
          %s735 = scalar_select %p734, %s18, 1
          %s736 = scalar_lea.vmem %s5, %s735
        $region97: #{decodeconv_forward.1} parent=84 // pred_fallthru
          _
      $region85: #{decodeconv_forward.1} parent=5 // pred_fallthru
        _
    $region6: #{decodeconv_forward.1} parent=1 // loop_footer
      %s16 = sadd.s32 1, %s12
    $region7: #{decodeconv_forward.1} parent=1 // loop_footer_branch
      %11 = sbr.rel target = $region3
    $region8: #{decodeconv_forward.1} parent=1 // loop_exit
      _

</llo_original>
